<compile_context>
chip_gen: v7x
topology: tpu7x:2x2x1
jax: 0.10.0
libtpu: 0.0.40
codegen_flags: <defaults>
</compile_context>

<pallas_src>
import jax
import jax.numpy as jnp
import numpy as np
from jax import lax
from jax.experimental import pallas as pl
from jax.experimental.pallas import tpu as pltpu

_BN_EPS = 1e-5

# Fixed TestNet geometry (hardcoded so the kernel stays a single lane-dense slab).
_H = _W = 8            # input spatial
_CI = 3                # input channels
_C1 = 8                # conv1 out channels
_C2 = 16               # conv2 out channels
_COUT = 2              # linear out features
_H1 = _W1 = 4          # conv1 output spatial (k=3, s=2, p=1)
_P1 = _H1 * _W1        # 16 conv1 output positions -> 16 lane groups of _C1
_LANES = _P1 * _C1     # 128 = exactly one vreg lane width
_K1 = 9 * _CI          # 27 im2col taps for conv1
# Lane-rotation schedule: accumulating rolls by 64,32,16,8 sums, for every lane l,
# all lanes l' == l (mod _C1), i.e. the 16 spatial positions sharing a channel.
_GROUP_SHIFTS = (64, 32, 16, 8)
assert _LANES == 128 and _C1 == 8


# ---------------------------------------------------------------------------
# Kernel
# ---------------------------------------------------------------------------
def testnet_kernel(patches_ref, wbd_ref, bn_ref, w2p_ref, wl_ref, bh_ref, o_ref):
    # ---- conv1: one block-diagonal im2col matmul -> y1 lane-packed (N, 128) ----
    # lane l = p*C1 + ci with p = oh1*4 + ow1.
    y1 = jnp.dot(patches_ref[...], wbd_ref[...], preferred_element_type=jnp.float32)
    y1 = y1 + bn_ref[0:1, :]                                   # conv1 bias (lane-tiled)

    # ---- bn1 (train-mode biased batch stats over N,H1,W1) + relu, in-register ----
    n_red = y1.shape[0] * _P1                                  # N * H1 * W1
    s = jnp.sum(y1, axis=0, keepdims=True)                     # (1, 128) sum over N
    for shift in _GROUP_SHIFTS:                                # per-channel sum, already
        s = s + pltpu.roll(s, shift=shift, axis=1)             # broadcast to each group
    mean = s * (1.0 / n_red)
    d = y1 - mean
    v = jnp.sum(d * d, axis=0, keepdims=True)                  # E[(y-mean)^2]: no cancellation
    for shift in _GROUP_SHIFTS:
        v = v + pltpu.roll(v, shift=shift, axis=1)
    inv = lax.rsqrt(v * (1.0 / n_red) + _BN_EPS)
    y1 = jnp.maximum(d * inv * bn_ref[1:2, :] + bn_ref[2:3, :], 0.0)

    # ---- conv2 (k=3,s=2,p=1) + AvgPool2d(2,1): one precomputed (128,16) linear map ----
    pooled = jnp.dot(y1, w2p_ref[...], preferred_element_type=jnp.float32)   # (N, C2)

    # ---- flatten + Linear(16 -> 2); conv2 bias folded into bh_ref in the wrapper ----
    o_ref[...] = jnp.dot(pooled, wl_ref[...], preferred_element_type=jnp.float32) + bh_ref[...]


# ---------------------------------------------------------------------------
# Wrapper (parameter repacks + conv1 im2col = layout plumbing, no x-dependent compute
# beyond the im2col gather the review asked to hoist)
# ---------------------------------------------------------------------------
def _conv1_im2col(x_nchw):
    """(N, Ci, 8, 8) NCHW -> (N, 16*9*Ci) lane-dense patches; lane = (p, kh*3+kw, ci)."""
    n = x_nchw.shape[0]
    xp = jnp.pad(x_nchw.astype(jnp.float32), ((0, 0), (0, 0), (1, 1), (1, 1)))
    taps = [xp[:, :, kh:kh + 2 * _H1:2, kw:kw + 2 * _W1:2]      # (N, Ci, 4, 4) stride-2 tap
            for kh in range(3) for kw in range(3)]
    pat = jnp.stack(taps, axis=-1)                              # (N, Ci, 4, 4, 9)
    pat = pat.transpose(0, 2, 3, 4, 1)                          # (N, 4, 4, 9, Ci)
    return pat.reshape(n, _P1 * _K1)                            # (N, 432)


def _conv2pool_weight(w2):
    """Effective (128, C2) linear map of conv2(k3,s2,p1 on the 4x4 map) + AvgPool2d(2,1)."""
    m = np.zeros((3, 3, _H1, _W1), np.float32)                  # static tap->position map
    for oh in range(2):
        for ow in range(2):
            for kh in range(3):
                for kw in range(3):
                    ih, iw = 2 * oh + kh - 1, 2 * ow + kw - 1
                    if 0 <= ih < _H1 and 0 <= iw < _W1:
                        m[kh, kw, ih, iw] += 1.0
    m = jnp.asarray(m) * 0.25                                   # avgpool of the 2x2 output
    w_eff = jnp.einsum('hwij,hwcd->ijcd', m, w2)                # (4, 4, C1, C2)
    return w_eff.reshape(_LANES, _C2)                           # row = p*C1 + ci (= y1 lane)


@jax.jit
def testnet_forward(x_nchw, params):
    w1, b1, g1, be1, w2, b2, wl, bl = params
    n = x_nchw.shape[0]
    assert x_nchw.shape[1:] == (_CI, _H, _W)

    patches = _conv1_im2col(x_nchw)                                            # (N, 432)
    # conv1 weight as a block-diagonal (432, 128) so conv1 emits lane-packed rows directly.
    wbd = jnp.kron(jnp.eye(_P1, dtype=jnp.float32), w1.reshape(_K1, _C1))      # (432, 128)
    # packed per-channel operands, tiled to the 128-lane layout: [b1; gamma; beta]
    bn_pack = jnp.stack([jnp.tile(b1, _P1), jnp.tile(g1, _P1), jnp.tile(be1, _P1)])  # (3,128)
    w2pool = _conv2pool_weight(w2)                                             # (128, 16)
    bhead = (b2 @ wl + bl).reshape(1, _COUT)                                   # fold conv2 bias

    vmem = pl.BlockSpec(memory_space=pltpu.MemorySpace.VMEM)
    return pl.pallas_call(
        testnet_kernel,
        out_shape=jax.ShapeDtypeStruct((n, _COUT), jnp.float32),
        in_specs=[vmem] * 6,
        out_specs=vmem,
    )(patches, wbd, bn_pack, w2pool, wl, bhead)


# ---------------------------------------------------------------------------
# Pure-JAX reference (same semantics as torch forward, train-mode BN)
# ---------------------------------------------------------------------------
def reference_forward(x_nchw, params):
    w1, b1, g1, be1, w2, b2, wl, bl = params
    x = jnp.transpose(x_nchw, (0, 2, 3, 1)).astype(jnp.float32)
    dn = ("NHWC", "HWIO", "NHWC")
    y = lax.conv_general_dilated(x, w1, (2, 2), ((1, 1), (1, 1)),
                                 dimension_numbers=dn) + b1
    mean = jnp.mean(y, axis=(0, 1, 2), keepdims=True)
    var = jnp.mean((y - mean) ** 2, axis=(0, 1, 2), keepdims=True)
    y = (y - mean) * lax.rsqrt(var + _BN_EPS) * g1 + be1
    y = jnp.maximum(y, 0.0)
    y = lax.conv_general_dilated(y, w2, (2, 2), ((1, 1), (1, 1)),
                                 dimension_numbers=dn) + b2
    pooled = jnp.mean(y, axis=(1, 2))          # AvgPool2d(2,1) on 2x2 -> 1x1, then flatten
    return pooled @ wl + bl


# ---------------------------------------------------------------------------
def make_params(key):
    keys = jax.random.split(key, 8)
    w1 = 0.2 * jax.random.normal(keys[0], (3, 3, _CI, _C1), jnp.float32)    # conv1 HWIO
    b1 = 0.1 * jax.random.normal(keys[1], (_C1,), jnp.float32)
    g1 = 1.0 + 0.1 * jax.random.normal(keys[2], (_C1,), jnp.float32)        # bn1 gamma
    be1 = 0.1 * jax.random.normal(keys[3], (_C1,), jnp.float32)             # bn1 beta
    w2 = 0.2 * jax.random.normal(keys[4], (3, 3, _C1, _C2), jnp.float32)    # conv2 HWIO
    b2 = 0.1 * jax.random.normal(keys[5], (_C2,), jnp.float32)
    wl = 0.2 * jax.random.normal(keys[6], (_C2, _COUT), jnp.float32)        # linear (in, out)
    bl = 0.1 * jax.random.normal(keys[7], (_COUT,), jnp.float32)
    return (w1, b1, g1, be1, w2, b2, wl, bl)


if __name__ == "__main__":
    root = jax.random.PRNGKey(0)
    pkey, xkey = jax.random.split(root)
    params = make_params(pkey)
    x = jax.random.normal(xkey, (2, _CI, _H, _W), jnp.float32)   # NCHW input, as in TestNet

    out = jax.block_until_ready(testnet_forward(x, params))

    ref = reference_forward(x, params)
    np.testing.assert_allclose(np.asarray(out), np.asarray(ref), atol=1e-4, rtol=1e-4)
    assert out.shape == (2, _COUT)

    print("KERNEL_OK")
</pallas_src>

<mosaic_0001>
module attributes {stable_mosaic.version = 11 : i64} {
  func.func @testnet_kernel(%arg0: memref<2x432xf32, #tpu.memory_space<vmem>>, %arg1: memref<432x128xf32, #tpu.memory_space<vmem>>, %arg2: memref<3x128xf32, #tpu.memory_space<vmem>>, %arg3: memref<128x16xf32, #tpu.memory_space<vmem>>, %arg4: memref<16x2xf32, #tpu.memory_space<vmem>>, %arg5: memref<1x2xf32, #tpu.memory_space<vmem>>, %arg6: memref<2x2xf32, #tpu.memory_space<vmem>>) attributes {dimension_semantics = [], scalar_prefetch = 0 : i64, scratch_operands = 0 : i64, tpu.core_type = #tpu.core_type<tc>} {
    %c0 = arith.constant 0 : index
    %c0_0 = arith.constant 0 : index
    %0 = vector.load %arg0[%c0, %c0_0] : memref<2x432xf32, #tpu.memory_space<vmem>>, vector<2x432xf32>
    %c0_1 = arith.constant 0 : index
    %c0_2 = arith.constant 0 : index
    %1 = vector.load %arg1[%c0_1, %c0_2] : memref<432x128xf32, #tpu.memory_space<vmem>>, vector<432x128xf32>
    %cst = arith.constant dense<0.000000e+00> : vector<2x128xf32>
    %2 = tpu.matmul %0, %1, %cst {dimension_numbers = #tpu.dot_dimension_numbers<[1], [0], [0], [1], [0, 0, 1, 1], [], []>} : vector<2x432xf32>, vector<432x128xf32>, vector<2x128xf32> -> vector<2x128xf32>
    %c0_3 = arith.constant 0 : index
    %c0_4 = arith.constant 0 : index
    %3 = vector.load %arg2[%c0_3, %c0_4] : memref<3x128xf32, #tpu.memory_space<vmem>>, vector<1x128xf32>
    %4 = vector.broadcast %3 : vector<1x128xf32> to vector<2x128xf32>
    %5 = arith.addf %2, %4 : vector<2x128xf32>
    %cst_5 = arith.constant dense<0.000000e+00> : vector<128xf32>
    %6 = vector.multi_reduction <add>, %5, %cst_5 [0] : vector<2x128xf32> to vector<128xf32>
    %7 = vector.shape_cast %6 : vector<128xf32> to vector<1x128xf32>
    %c64_i32 = arith.constant 64 : i32
    %8 = tpu.dynamic_rotate %7 by %c64_i32 dim 1 : vector<1x128xf32>, i32 -> vector<1x128xf32>
    %9 = arith.addf %7, %8 : vector<1x128xf32>
    %c32_i32 = arith.constant 32 : i32
    %10 = tpu.dynamic_rotate %9 by %c32_i32 dim 1 : vector<1x128xf32>, i32 -> vector<1x128xf32>
    %11 = arith.addf %9, %10 : vector<1x128xf32>
    %c16_i32 = arith.constant 16 : i32
    %12 = tpu.dynamic_rotate %11 by %c16_i32 dim 1 : vector<1x128xf32>, i32 -> vector<1x128xf32>
    %13 = arith.addf %11, %12 : vector<1x128xf32>
    %c8_i32 = arith.constant 8 : i32
    %14 = tpu.dynamic_rotate %13 by %c8_i32 dim 1 : vector<1x128xf32>, i32 -> vector<1x128xf32>
    %15 = arith.addf %13, %14 : vector<1x128xf32>
    %cst_6 = arith.constant 3.125000e-02 : f32
    %16 = vector.broadcast %cst_6 : f32 to vector<1x128xf32>
    %17 = arith.mulf %15, %16 : vector<1x128xf32>
    %18 = vector.broadcast %17 : vector<1x128xf32> to vector<2x128xf32>
    %19 = arith.subf %5, %18 : vector<2x128xf32>
    %20 = arith.mulf %19, %19 : vector<2x128xf32>
    %cst_7 = arith.constant dense<0.000000e+00> : vector<128xf32>
    %21 = vector.multi_reduction <add>, %20, %cst_7 [0] : vector<2x128xf32> to vector<128xf32>
    %22 = vector.shape_cast %21 : vector<128xf32> to vector<1x128xf32>
    %c64_i32_8 = arith.constant 64 : i32
    %23 = tpu.dynamic_rotate %22 by %c64_i32_8 dim 1 : vector<1x128xf32>, i32 -> vector<1x128xf32>
    %24 = arith.addf %22, %23 : vector<1x128xf32>
    %c32_i32_9 = arith.constant 32 : i32
    %25 = tpu.dynamic_rotate %24 by %c32_i32_9 dim 1 : vector<1x128xf32>, i32 -> vector<1x128xf32>
    %26 = arith.addf %24, %25 : vector<1x128xf32>
    %c16_i32_10 = arith.constant 16 : i32
    %27 = tpu.dynamic_rotate %26 by %c16_i32_10 dim 1 : vector<1x128xf32>, i32 -> vector<1x128xf32>
    %28 = arith.addf %26, %27 : vector<1x128xf32>
    %c8_i32_11 = arith.constant 8 : i32
    %29 = tpu.dynamic_rotate %28 by %c8_i32_11 dim 1 : vector<1x128xf32>, i32 -> vector<1x128xf32>
    %30 = arith.addf %28, %29 : vector<1x128xf32>
    %cst_12 = arith.constant 3.125000e-02 : f32
    %31 = vector.broadcast %cst_12 : f32 to vector<1x128xf32>
    %32 = arith.mulf %30, %31 : vector<1x128xf32>
    %cst_13 = arith.constant 9.99999974E-6 : f32
    %33 = vector.broadcast %cst_13 : f32 to vector<1x128xf32>
    %34 = arith.addf %32, %33 : vector<1x128xf32>
    %35 = math.rsqrt %34 : vector<1x128xf32>
    %36 = vector.broadcast %35 : vector<1x128xf32> to vector<2x128xf32>
    %37 = arith.mulf %19, %36 : vector<2x128xf32>
    %c1 = arith.constant 1 : index
    %c0_14 = arith.constant 0 : index
    %38 = vector.load %arg2[%c1, %c0_14] : memref<3x128xf32, #tpu.memory_space<vmem>>, vector<1x128xf32>
    %39 = vector.broadcast %38 : vector<1x128xf32> to vector<2x128xf32>
    %40 = arith.mulf %37, %39 : vector<2x128xf32>
    %c2 = arith.constant 2 : index
    %c0_15 = arith.constant 0 : index
    %41 = vector.load %arg2[%c2, %c0_15] : memref<3x128xf32, #tpu.memory_space<vmem>>, vector<1x128xf32>
    %42 = vector.broadcast %41 : vector<1x128xf32> to vector<2x128xf32>
    %43 = arith.addf %40, %42 : vector<2x128xf32>
    %cst_16 = arith.constant 0.000000e+00 : f32
    %44 = vector.broadcast %cst_16 : f32 to vector<2x128xf32>
    %45 = arith.maximumf %43, %44 : vector<2x128xf32>
    %c0_17 = arith.constant 0 : index
    %c0_18 = arith.constant 0 : index
    %46 = vector.load %arg3[%c0_17, %c0_18] : memref<128x16xf32, #tpu.memory_space<vmem>>, vector<128x16xf32>
    %cst_19 = arith.constant dense<0.000000e+00> : vector<2x16xf32>
    %47 = tpu.matmul %45, %46, %cst_19 {dimension_numbers = #tpu.dot_dimension_numbers<[1], [0], [0], [1], [0, 0, 1, 1], [], []>} : vector<2x128xf32>, vector<128x16xf32>, vector<2x16xf32> -> vector<2x16xf32>
    %c0_20 = arith.constant 0 : index
    %c0_21 = arith.constant 0 : index
    %48 = vector.load %arg4[%c0_20, %c0_21] : memref<16x2xf32, #tpu.memory_space<vmem>>, vector<16x2xf32>
    %cst_22 = arith.constant dense<0.000000e+00> : vector<2x2xf32>
    %49 = tpu.matmul %47, %48, %cst_22 {dimension_numbers = #tpu.dot_dimension_numbers<[1], [0], [0], [1], [0, 0, 1, 1], [], []>} : vector<2x16xf32>, vector<16x2xf32>, vector<2x2xf32> -> vector<2x2xf32>
    %c0_23 = arith.constant 0 : index
    %c0_24 = arith.constant 0 : index
    %50 = vector.load %arg5[%c0_23, %c0_24] : memref<1x2xf32, #tpu.memory_space<vmem>>, vector<1x2xf32>
    %51 = vector.broadcast %50 : vector<1x2xf32> to vector<2x2xf32>
    %52 = arith.addf %49, %51 : vector<2x2xf32>
    %c0_25 = arith.constant 0 : index
    %c0_26 = arith.constant 0 : index
    %53 = vector.load %arg6[%c0_25, %c0_26] : memref<2x2xf32, #tpu.memory_space<vmem>>, vector<2x2xf32>
    tpu.vector_store %arg6[%c0_25, %c0_26], %52 {strides = array<i32>} : memref<2x2xf32, #tpu.memory_space<vmem>>, vector<2x2xf32>,
    return
  }
}

</mosaic_0001>

<llo_original>
// kernel: mul.4
$region0: #{mul.4}
  %s0 = inlined_call_operand.vmem [shape: f32[3,3,3,8], index: 0, kind: input, shape index: {}]
  %s1 = inlined_call_operand.vmem [shape: f32[27,8], index: 1, kind: output, shape index: {}]
  $region1: #{mul.4} parent=0
    #allocation0 [shape = 'u8[36864]{0}', space=vmem, size = 0x9000, scoped, tag = 'scoped mem for input reshape']
    %s3 = sshllo.u32 0, 4
    %s4 = smul.addr 4, 8
    %s5 = scalar_lea.vmem %s0, %s4
    %v6 = vld [vmem:[%s5] sm:%s3]
    %s7 = scalar_lea.vmem [#allocation0], 64
    %8 = vst [vmem:[%s7] sm:%s3] %v6
    %s9 = smul.addr 4, 7
    %s10 = scalar_lea.vmem %s0, %s9
    %v11 = vld [vmem:[%s10] sm:%s3]
    %s12 = scalar_lea.vmem [#allocation0], 56
    %13 = vst [vmem:[%s12] sm:%s3] %v11
    %s14 = smul.addr 4, 6
    %s15 = scalar_lea.vmem %s0, %s14
    %v16 = vld [vmem:[%s15] sm:%s3]
    %s17 = scalar_lea.vmem [#allocation0], 48
    %18 = vst [vmem:[%s17] sm:%s3] %v16
    %s19 = smul.addr 4, 5
    %s20 = scalar_lea.vmem %s0, %s19
    %v21 = vld [vmem:[%s20] sm:%s3]
    %s22 = scalar_lea.vmem [#allocation0], 40
    %23 = vst [vmem:[%s22] sm:%s3] %v21
    %s24 = smul.addr 4, 4
    %s25 = scalar_lea.vmem %s0, %s24
    %v26 = vld [vmem:[%s25] sm:%s3]
    %s27 = scalar_lea.vmem [#allocation0], 32
    %28 = vst [vmem:[%s27] sm:%s3] %v26
    %s29 = smul.addr 4, 3
    %s30 = scalar_lea.vmem %s0, %s29
    %v31 = vld [vmem:[%s30] sm:%s3]
    %s32 = scalar_lea.vmem [#allocation0], 24
    %33 = vst [vmem:[%s32] sm:%s3] %v31
    %s34 = smul.addr 4, 2
    %s35 = scalar_lea.vmem %s0, %s34
    %v36 = vld [vmem:[%s35] sm:%s3]
    %s37 = scalar_lea.vmem [#allocation0], 16
    %38 = vst [vmem:[%s37] sm:%s3] %v36
    %s39 = scalar_lea.vmem %s0, 4
    %v40 = vld [vmem:[%s39] sm:%s3]
    %s41 = scalar_lea.vmem [#allocation0], 8
    %42 = vst [vmem:[%s41] sm:%s3] %v40
    %v43 = vld [vmem:[%s0] sm:%s3]
    %44 = vst [vmem:[#allocation0] sm:%s3] %v43
    %v45 = vld [vmem:[#allocation0] sm:$0x7]
    %vm46 = vcmask 64512
    %47 = vst.msk [vmem:[%s1] sm:$0x7] %vm46, %v45
    %s48 = scalar_lea.vmem [#allocation0], 8
    %v49 = vld [vmem:[%s48] sm:$0x7]
    %vm50 = vcmask 64512
    %s51 = scalar_lea.vmem %s1, 3
    %52 = vst.msk [vmem:[%s51] sm:$0x7] %vm50, %v49
    %s53 = scalar_lea.vmem [#allocation0], 16
    %v54 = vld [vmem:[%s53] sm:$0x7]
    %vm55 = vcmask 64512
    %s56 = scalar_lea.vmem %s1, 6
    %57 = vst.msk [vmem:[%s56] sm:$0x7] %vm55, %v54
    %s58 = scalar_lea.vmem [#allocation0], 24
    %v59 = vld [vmem:[%s58] sm:$0x7]
    %vm60 = vcmask 64512
    %s61 = scalar_lea.vmem %s1, 9
    %62 = vst.msk [vmem:[%s61] sm:$0x7] %vm60, %v59
    %s63 = scalar_lea.vmem [#allocation0], 32
    %v64 = vld [vmem:[%s63] sm:$0x7]
    %vm65 = vcmask 64512
    %s66 = scalar_lea.vmem %s1, 12
    %67 = vst.msk [vmem:[%s66] sm:$0x7] %vm65, %v64
    %s68 = scalar_lea.vmem [#allocation0], 40
    %v69 = vld [vmem:[%s68] sm:$0x7]
    %vm70 = vcmask 64512
    %s71 = scalar_lea.vmem %s1, 15
    %72 = vst.msk [vmem:[%s71] sm:$0x7] %vm70, %v69
    %s73 = scalar_lea.vmem [#allocation0], 48
    %v74 = vld [vmem:[%s73] sm:$0x7]
    %vm75 = vcmask 64512
    %s76 = scalar_lea.vmem %s1, 18
    %77 = vst.msk [vmem:[%s76] sm:$0x7] %vm75, %v74
    %s78 = scalar_lea.vmem [#allocation0], 56
    %v79 = vld [vmem:[%s78] sm:$0x7]
    %vm80 = vcmask 64512
    %s81 = scalar_lea.vmem %s1, 21
    %82 = vst.msk [vmem:[%s81] sm:$0x7] %vm80, %v79
    %s83 = scalar_lea.vmem [#allocation0], 64
    %v84 = vld [vmem:[%s83] sm:$0x7]
    %vm85 = vcmask 64512
    %s86 = scalar_lea.vmem %s1, 24
    %87 = vst.msk [vmem:[%s86] sm:$0x7] %vm85, %v84

// kernel: tile.18
$region0: #{tile.18}
  #allocation0 [shape = 's32[1]{0}', space=sflag, size = 0x4, scoped, tag = 'scoped memory for tile.18']
  %s0 = inlined_call_operand.vmem [shape: f32[8], index: 0, kind: input, shape index: {}]
  %s1 = inlined_call_operand.vmem [shape: f32[16,8], index: 1, kind: output, shape index: {}]
  // Predicated region
  $region2: #{tile.18} parent=0 // pred_check
    _
  $region3: #{tile.18} parent=0 // pred_check_branch
    %3 = sbr.rel (0) target = $region5
  $region4: #{tile.18} parent=0 // pred_region
    _
  $region5: #{tile.18} parent=0 // pred_fallthru
    _
  %v4 = vld [vmem:[%s0] ss:$0 sm:$0xff]
  %5 = vst [vmem:[%s1] sm:$0xff] %v4
  %s6 = scalar_lea.vmem %s1, 8
  %7 = vst [vmem:[%s6] sm:$0xff] %v4

// kernel: tile.27
$region0: #{tile.27}
  %s0 = inlined_call_operand.vmem [shape: f32[16,8], index: 0, kind: input, shape index: {}]
  %s1 = inlined_call_operand.vmem [shape: f32[1,128], index: 1, kind: output, shape index: {}]
  $region1: #{tile.27} parent=0
    #allocation0 [shape = 'u8[4096]{0}', space=vmem, size = 0x1000, scoped, tag = 'scoped mem for output reshape']
    %v2 = vld [vmem:[%s0] sm:$0x1]
    %vm3 = vcmask 64512
    %4 = vst.msk [vmem:[#allocation0] sm:$0x1] %vm3, %v2
    %s5 = scalar_lea.vmem %s0, 15
    %v6 = vld [vmem:[%s5] sm:$0x1]
    %7 = vrot.lane.b32.xlu0 %v6, 120
    %v8 = vpop.permute.xlu0 %7
    %vm9 = vcmask 1048512
    %10 = vst.msk [vmem:[#allocation0] sm:$0x1] %vm9, %v8
    %s11 = scalar_lea.vmem %s0, 14
    %v12 = vld [vmem:[%s11] sm:$0x1]
    %13 = vrot.lane.b32.xlu0 %v12, 112
    %v14 = vpop.permute.xlu0 %13
    %vm15 = vcmask 982912
    %16 = vst.msk [vmem:[#allocation0] sm:$0x1] %vm15, %v14
    %s17 = scalar_lea.vmem %s0, 13
    %v18 = vld [vmem:[%s17] sm:$0x1]
    %19 = vrot.lane.b32.xlu0 %v18, 104
    %v20 = vpop.permute.xlu0 %19
    %vm21 = vcmask 917312
    %22 = vst.msk [vmem:[#allocation0] sm:$0x1] %vm21, %v20
    %s23 = scalar_lea.vmem %s0, 12
    %v24 = vld [vmem:[%s23] sm:$0x1]
    %25 = vrot.lane.b32.xlu0 %v24, 96
    %v26 = vpop.permute.xlu0 %25
    %vm27 = vcmask 851712
    %28 = vst.msk [vmem:[#allocation0] sm:$0x1] %vm27, %v26
    %s29 = scalar_lea.vmem %s0, 11
    %v30 = vld [vmem:[%s29] sm:$0x1]
    %31 = vrot.lane.b32.xlu0 %v30, 88
    %v32 = vpop.permute.xlu0 %31
    %vm33 = vcmask 786112
    %34 = vst.msk [vmem:[#allocation0] sm:$0x1] %vm33, %v32
    %s35 = scalar_lea.vmem %s0, 10
    %v36 = vld [vmem:[%s35] sm:$0x1]
    %37 = vrot.lane.b32.xlu0 %v36, 80
    %v38 = vpop.permute.xlu0 %37
    %vm39 = vcmask 720512
    %40 = vst.msk [vmem:[#allocation0] sm:$0x1] %vm39, %v38
    %s41 = scalar_lea.vmem %s0, 9
    %v42 = vld [vmem:[%s41] sm:$0x1]
    %43 = vrot.lane.b32.xlu0 %v42, 72
    %v44 = vpop.permute.xlu0 %43
    %vm45 = vcmask 654912
    %46 = vst.msk [vmem:[#allocation0] sm:$0x1] %vm45, %v44
    %s47 = scalar_lea.vmem %s0, 8
    %v48 = vld [vmem:[%s47] sm:$0x1]
    %49 = vrot.lane.b32.xlu0 %v48, 64
    %v50 = vpop.permute.xlu0 %49
    %vm51 = vcmask 589312
    %52 = vst.msk [vmem:[#allocation0] sm:$0x1] %vm51, %v50
    %s53 = scalar_lea.vmem %s0, 7
    %v54 = vld [vmem:[%s53] sm:$0x1]
    %55 = vrot.lane.b32.xlu0 %v54, 56
    %v56 = vpop.permute.xlu0 %55
    %vm57 = vcmask 523712
    %58 = vst.msk [vmem:[#allocation0] sm:$0x1] %vm57, %v56
    %s59 = scalar_lea.vmem %s0, 6
    %v60 = vld [vmem:[%s59] sm:$0x1]
    %61 = vrot.lane.b32.xlu0 %v60, 48
    %v62 = vpop.permute.xlu0 %61
    %vm63 = vcmask 458112
    %64 = vst.msk [vmem:[#allocation0] sm:$0x1] %vm63, %v62
    %s65 = scalar_lea.vmem %s0, 5
    %v66 = vld [vmem:[%s65] sm:$0x1]
    %67 = vrot.lane.b32.xlu0 %v66, 40
    %v68 = vpop.permute.xlu0 %67
    %vm69 = vcmask 392512
    %70 = vst.msk [vmem:[#allocation0] sm:$0x1] %vm69, %v68
    %s71 = scalar_lea.vmem %s0, 4
    %v72 = vld [vmem:[%s71] sm:$0x1]
    %73 = vrot.lane.b32.xlu0 %v72, 32
    %v74 = vpop.permute.xlu0 %73
    %vm75 = vcmask 326912
    %76 = vst.msk [vmem:[#allocation0] sm:$0x1] %vm75, %v74
    %s77 = scalar_lea.vmem %s0, 3
    %v78 = vld [vmem:[%s77] sm:$0x1]
    %79 = vrot.lane.b32.xlu0 %v78, 24
    %v80 = vpop.permute.xlu0 %79
    %vm81 = vcmask 261312
    %82 = vst.msk [vmem:[#allocation0] sm:$0x1] %vm81, %v80
    %s83 = scalar_lea.vmem %s0, 2
    %v84 = vld [vmem:[%s83] sm:$0x1]
    %85 = vrot.lane.b32.xlu0 %v84, 16
    %v86 = vpop.permute.xlu0 %85
    %vm87 = vcmask 195712
    %88 = vst.msk [vmem:[#allocation0] sm:$0x1] %vm87, %v86
    %s89 = scalar_lea.vmem %s0, 1
    %v90 = vld [vmem:[%s89] sm:$0x1]
    %91 = vrot.lane.b32.xlu0 %v90, 8
    %v92 = vpop.permute.xlu0 %91
    %vm93 = vcmask 130112
    %94 = vst.msk [vmem:[#allocation0] sm:$0x1] %vm93, %v92
    %s96 = sshllo.u32 0, 1
    %v98 = vld [vmem:[#allocation0] sm:%s96]
    %s99 = sshllo.u32 0, 1
    %100 = vst [vmem:[%s1] sm:%s99] %v98

// kernel: testnet_forward.1
$region0: #{testnet_forward.1}
  #allocation0 [shape = 'u32[]', space=smem, size = 0x4, offset = 0x4, fixed_abs, tag = 'smem constant byte address 0x4 - core index']
  #allocation1 [shape = 'u32[144,128]{1,0:T(1,128)}', space=vmem, size = 0x12000, scoped, tag = 'internal scratch']
  %s0 = inlined_call_operand.vmem [shape: f32[2,432], index: 0, kind: input, shape index: {}]
  %s1 = inlined_call_operand.vmem [shape: f32[432,128], index: 1, kind: input, shape index: {}]
  %s2 = inlined_call_operand.vmem [shape: f32[3,128], index: 2, kind: input, shape index: {}]
  %s3 = inlined_call_operand.vmem [shape: f32[128,16], index: 3, kind: input, shape index: {}]
  %s4 = inlined_call_operand.vmem [shape: f32[16,2], index: 4, kind: input, shape index: {}]
  %s5 = inlined_call_operand.vmem [shape: f32[1,2], index: 5, kind: input, shape index: {}]
  %s6 = inlined_call_operand.hbm [shape: f32[2,2], index: 6, kind: output, shape index: {}]
  %s7 = sld [smem:[#allocation0]]
  $region34: #{testnet_forward.1} parent=0
    _
  %s9 = ssub.s32 1, %s7
  %s10 = scalar_select 0, %s9, %s7
  $region1: #{testnet_forward.1} parent=0
    #allocation2 [shape = 'u8[1024]{0}', space=vmem, size = 0x400, scoped, tag = 'output window, operand 0, single buffered']
    #allocation3 [shape = 's32[1]{0}', space=sflag, size = 0x4, scoped, tag = 'scoped memory for testnet_forward.1']
    %11 = vsyncpa [#allocation3], 0
    // Predicated region
    $region2: #{testnet_forward.1} parent=1 // pred_check
      _
    $region3: #{testnet_forward.1} parent=1 // pred_check_branch
      %13 = sbr.rel (0) target = $region5
    $region4: #{testnet_forward.1} parent=1 // pred_region
      _
    $region5: #{testnet_forward.1} parent=1 // pred_fallthru
      _
    // Predicated region
    $region6: #{testnet_forward.1} parent=1 // pred_check
      _
    $region7: #{testnet_forward.1} parent=1 // pred_check_branch
      %15 = sbr.rel (0) target = $region9
    $region8: #{testnet_forward.1} parent=1 // pred_region
      _
    $region9: #{testnet_forward.1} parent=1 // pred_fallthru
      _
    // Predicated region
    $region10: #{testnet_forward.1} parent=1 // pred_check
      _
    $region11: #{testnet_forward.1} parent=1 // pred_check_branch
      %17 = sbr.rel (0) target = $region13
    $region12: #{testnet_forward.1} parent=1 // pred_region
      _
    $region13: #{testnet_forward.1} parent=1 // pred_fallthru
      _
    // Predicated region
    $region14: #{testnet_forward.1} parent=1 // pred_check
      _
    $region15: #{testnet_forward.1} parent=1 // pred_check_branch
      %19 = sbr.rel (0) target = $region17
    $region16: #{testnet_forward.1} parent=1 // pred_region
      _
    $region17: #{testnet_forward.1} parent=1 // pred_fallthru
      _
    // Predicated region
    $region18: #{testnet_forward.1} parent=1 // pred_check
      _
    $region19: #{testnet_forward.1} parent=1 // pred_check_branch
      %21 = sbr.rel (0) target = $region21
    $region20: #{testnet_forward.1} parent=1 // pred_region
      _
    $region21: #{testnet_forward.1} parent=1 // pred_fallthru
      _
    // Predicated region
    $region22: #{testnet_forward.1} parent=1 // pred_check
      _
    $region23: #{testnet_forward.1} parent=1 // pred_check_branch
      %23 = sbr.rel (0) target = $region25
    $region24: #{testnet_forward.1} parent=1 // pred_region
      _
    $region25: #{testnet_forward.1} parent=1 // pred_fallthru
      _
    %v24 = vld [vmem:[%s0] sm:$0xff]
    %v25 = vld [vmem:[%s1] sm:$0xff]
    %v26 = vld [vmem:[%s1 + $0x8] sm:$0xff]
    %v27 = vld [vmem:[%s1 + $0x10] sm:$0xff]
    %v28 = vld [vmem:[%s1 + $0x18] sm:$0xff]
    %v29 = vld [vmem:[%s1 + $0x20] sm:$0xff]
    %v30 = vld [vmem:[%s1 + $0x28] sm:$0xff]
    %v31 = vld [vmem:[%s1 + $0x30] sm:$0xff]
    %v32 = vld [vmem:[%s1 + $0x38] sm:$0xff]
    %v33 = vld [vmem:[%s1 + $0x40] sm:$0xff]
    %v34 = vld [vmem:[%s1 + $0x48] sm:$0xff]
    %v35 = vld [vmem:[%s1 + $0x50] sm:$0xff]
    %v36 = vld [vmem:[%s1 + $0x58] sm:$0xff]
    %v37 = vld [vmem:[%s1 + $0x60] sm:$0xff]
    %v38 = vld [vmem:[%s1 + $0x68] sm:$0xff]
    %v39 = vld [vmem:[%s1 + $0x70] sm:$0xff]
    %v40 = vld [vmem:[%s1 + $0x78] sm:$0xff]
    %v41 = vld [vmem:[%s1 + $0x80] sm:$0xff]
    %v42 = vld [vmem:[%s1 + $0x88] sm:$0xff]
    %v43 = vld [vmem:[%s1 + $0x90] sm:$0xff]
    %v44 = vld [vmem:[%s1 + $0x98] sm:$0xff]
    %v45 = vld [vmem:[%s1 + $0xa0] sm:$0xff]
    %v46 = vld [vmem:[%s1 + $0xa8] sm:$0xff]
    %v47 = vld [vmem:[%s1 + $0xb0] sm:$0xff]
    %v48 = vld [vmem:[%s1 + $0xb8] sm:$0xff]
    %v49 = vld [vmem:[%s1 + $0xc0] sm:$0xff]
    %v50 = vld [vmem:[%s1 + $0xc8] sm:$0xff]
    %v51 = vld [vmem:[%s1 + $0xd0] sm:$0xff]
    %v52 = vld [vmem:[%s1 + $0xd8] sm:$0xff]
    %v53 = vld [vmem:[%s1 + $0xe0] sm:$0xff]
    %v54 = vld [vmem:[%s1 + $0xe8] sm:$0xff]
    %v55 = vld [vmem:[%s1 + $0xf0] sm:$0xff]
    %v56 = vld [vmem:[%s1 + $0xf8] sm:$0xff]
    %v57 = vld [vmem:[%s1 + $0x100] sm:$0xff]
    %v58 = vld [vmem:[%s1 + $0x108] sm:$0xff]
    %v59 = vld [vmem:[%s1 + $0x110] sm:$0xff]
    %v60 = vld [vmem:[%s1 + $0x118] sm:$0xff]
    %v61 = vld [vmem:[%s1 + $0x120] sm:$0xff]
    %v62 = vld [vmem:[%s1 + $0x128] sm:$0xff]
    %v63 = vld [vmem:[%s1 + $0x130] sm:$0xff]
    %v64 = vld [vmem:[%s1 + $0x138] sm:$0xff]
    %v65 = vld [vmem:[%s1 + $0x140] sm:$0xff]
    %v66 = vld [vmem:[%s1 + $0x148] sm:$0xff]
    %v67 = vld [vmem:[%s1 + $0x150] sm:$0xff]
    %v68 = vld [vmem:[%s1 + $0x158] sm:$0xff]
    %v69 = vld [vmem:[%s1 + $0x160] sm:$0xff]
    %v70 = vld [vmem:[%s1 + $0x168] sm:$0xff]
    %v71 = vld [vmem:[%s1 + $0x170] sm:$0xff]
    %v72 = vld [vmem:[%s1 + $0x178] sm:$0xff]
    %v73 = vld [vmem:[%s1 + $0x180] sm:$0xff]
    %v74 = vld [vmem:[%s1 + $0x188] sm:$0xff]
    %v75 = vld [vmem:[%s1 + $0x190] sm:$0xff]
    %v76 = vld [vmem:[%s1 + $0x198] sm:$0xff]
    %v77 = vld [vmem:[%s1 + $0x1a0] sm:$0xff]
    %v78 = vld [vmem:[%s1 + $0x1a8] sm:$0xff]
    %v79 = vld [vmem:[%s2] sm:$0x1]
    %v80 = vlaneseq
    %v81 = vshrl.u32 %v80, 7
    %v82 = vsub.s32 0, %v81
    %v83 = vrot.slane %v79, %v82
    %v85 = vcombine.high %v24, %v24
    %v87 = vunpack.c.l.s4 1983009808
    %v88 = vunpack.c.0.s8 %v87
    %v89 = vlaneseq
    %v90 = vshrl.u32 %v89, 7
    %v91 = vsub.s32 %v88, %v90
    %v92 = vrot.slane %v24, %v91
    %v94 = vunpack.c.l.s4 1983009808
    %v95 = vunpack.c.0.s8 %v94
    %v96 = vlaneseq
    %v97 = vshrl.u32 %v96, 7
    %v98 = vsub.s32 %v95, %v97
    %v99 = vrot.slane %v85, %v98
    %v100 = vcombine.high %v92, %v92
    %v101 = vcombine.high %v99, %v99
    %vm105 = vcmask 392192
    %v106 = vsel %vm105, %v101, 0
    %108 = vmatprep.subr.mxu0 0.0
    %109 = vmatpush1.msra.mxu0 %v25
    %110 = vmatprep.subr.mxu0 0.0
    %111 = vmatpush1.msra.mxu0 %v26
    %112 = vmatprep.subr.mxu0 0.0
    %113 = vmatpush1.msra.mxu0 %v27
    %114 = vmatprep.subr.mxu0 0.0
    %115 = vmatpush1.msra.mxu0 %v28
    %116 = vmatprep.subr.mxu0 0.0
    %117 = vmatpush1.msra.mxu0 %v29
    %118 = vmatprep.subr.mxu0 0.0
    %119 = vmatpush1.msra.mxu0 %v30
    %120 = vmatprep.subr.mxu0 0.0
    %121 = vmatpush1.msra.mxu0 %v31
    %122 = vmatprep.subr.mxu0 0.0
    %123 = vmatpush1.msra.mxu0 %v32
    %124 = vmatprep.subr.mxu0 0.0
    %125 = vmatpush1.msra.mxu0 %v33
    %126 = vmatprep.subr.mxu0 0.0
    %127 = vmatpush1.msra.mxu0 %v34
    %128 = vmatprep.subr.mxu0 0.0
    %129 = vmatpush1.msra.mxu0 %v35
    %130 = vmatprep.subr.mxu0 0.0
    %131 = vmatpush1.msra.mxu0 %v36
    %132 = vmatprep.subr.mxu0 0.0
    %133 = vmatpush1.msra.mxu0 %v37
    %134 = vmatprep.subr.mxu0 0.0
    %135 = vmatpush1.msra.mxu0 %v38
    %136 = vmatprep.subr.mxu0 0.0
    %137 = vmatpush1.msra.mxu0 %v39
    %138 = vmatprep.subr.mxu0 0.0
    %139 = vmatpush1.msra.mxu0 %v40
    %140 = vmatprep.subr.mxu0 0.0
    %141 = vmatpush1.msra.mxu0 %v41
    %142 = vmatprep.subr.mxu0 0.0
    %143 = vmatpush1.msra.mxu0 %v42
    %144 = vmatprep.subr.mxu0 0.0
    %145 = vmatpush1.msra.mxu0 %v43
    %146 = vmatprep.subr.mxu0 0.0
    %147 = vmatpush1.msra.mxu0 %v44
    %148 = vmatprep.subr.mxu0 0.0
    %149 = vmatpush1.msra.mxu0 %v45
    %150 = vmatprep.subr.mxu0 0.0
    %151 = vmatpush1.msra.mxu0 %v46
    %152 = vmatprep.subr.mxu0 0.0
    %153 = vmatpush1.msra.mxu0 %v47
    %154 = vmatprep.subr.mxu0 0.0
    %155 = vmatpush1.msra.mxu0 %v48
    %156 = vmatprep.subr.mxu0 0.0
    %157 = vmatpush1.msra.mxu0 %v49
    %158 = vmatprep.subr.mxu0 0.0
    %159 = vmatpush1.msra.mxu0 %v50
    %160 = vmatprep.subr.mxu0 0.0
    %161 = vmatpush1.msra.mxu0 %v51
    %162 = vmatprep.subr.mxu0 0.0
    %163 = vmatpush1.msra.mxu0 %v52
    %164 = vmatprep.subr.mxu0 0.0
    %165 = vmatpush1.msra.mxu0 %v53
    %166 = vmatprep.subr.mxu0 0.0
    %167 = vmatpush1.msra.mxu0 %v54
    %168 = vmatprep.subr.mxu0 0.0
    %169 = vmatpush1.msra.mxu0 %v55
    %170 = vmatprep.subr.mxu0 0.0
    %171 = vmatpush1.msra.mxu0 %v56
    %172 = vmatprep.mubr.f32.mxu0 %v100
    %173 = vmatmul.mubr.f32.gmra.mrb[0].mxu0 %v92
    %v174 = vpop.f32.mrb[0].mxu0
    %v175 = vadd.f32 %v83, %v174
    %v176 = vpop.f32.mrb[0].mxu0
    %177 = vdwg.mxu0
    %178 = vmatprep.subr.mxu0 0.0
    %179 = vmatpush1.msra.mxu0 %v57
    %180 = vmatprep.subr.mxu0 0.0
    %181 = vmatpush1.msra.mxu0 %v58
    %182 = vmatprep.subr.mxu0 0.0
    %183 = vmatpush1.msra.mxu0 %v59
    %184 = vmatprep.subr.mxu0 0.0
    %185 = vmatpush1.msra.mxu0 %v60
    %186 = vmatprep.subr.mxu0 0.0
    %187 = vmatpush1.msra.mxu0 %v61
    %188 = vmatprep.subr.mxu0 0.0
    %189 = vmatpush1.msra.mxu0 %v62
    %190 = vmatprep.subr.mxu0 0.0
    %191 = vmatpush1.msra.mxu0 %v63
    %192 = vmatprep.subr.mxu0 0.0
    %193 = vmatpush1.msra.mxu0 %v64
    %194 = vmatprep.subr.mxu0 0.0
    %195 = vmatpush1.msra.mxu0 %v65
    %196 = vmatprep.subr.mxu0 0.0
    %197 = vmatpush1.msra.mxu0 %v66
    %198 = vmatprep.subr.mxu0 0.0
    %199 = vmatpush1.msra.mxu0 %v67
    %200 = vmatprep.subr.mxu0 0.0
    %201 = vmatpush1.msra.mxu0 %v68
    %202 = vmatprep.subr.mxu0 0.0
    %203 = vmatpush1.msra.mxu0 %v69
    %204 = vmatprep.subr.mxu0 0.0
    %205 = vmatpush1.msra.mxu0 %v70
    %206 = vmatprep.subr.mxu0 0.0
    %207 = vmatpush1.msra.mxu0 %v71
    %208 = vmatprep.subr.mxu0 0.0
    %209 = vmatpush1.msra.mxu0 %v72
    %210 = vmatprep.subr.mxu0 0.0
    %211 = vmatpush1.msra.mxu0 %v73
    %212 = vmatprep.subr.mxu0 0.0
    %213 = vmatpush1.msra.mxu0 %v74
    %214 = vmatprep.subr.mxu0 0.0
    %215 = vmatpush1.msra.mxu0 %v75
    %216 = vmatprep.subr.mxu0 0.0
    %217 = vmatpush1.msra.mxu0 %v76
    %218 = vmatprep.subr.mxu0 0.0
    %219 = vmatpush1.msra.mxu0 %v77
    %220 = vmatprep.subr.mxu0 0.0
    %221 = vmatpush1.msra.mxu0 %v78
    %222 = vmatprep.subr.mxu0 0.0
    %223 = vmatpush1.msra.mxu0 0.0
    %224 = vmatprep.subr.mxu0 0.0
    %225 = vmatpush1.msra.mxu0 0.0
    %226 = vmatprep.subr.mxu0 0.0
    %227 = vmatpush1.msra.mxu0 0.0
    %228 = vmatprep.subr.mxu0 0.0
    %229 = vmatpush1.msra.mxu0 0.0
    %230 = vmatprep.subr.mxu0 0.0
    %231 = vmatpush1.msra.mxu0 0.0
    %232 = vmatprep.subr.mxu0 0.0
    %233 = vmatpush1.msra.mxu0 0.0
    %234 = vmatprep.subr.mxu0 0.0
    %235 = vmatpush1.msra.mxu0 0.0
    %236 = vmatprep.subr.mxu0 0.0
    %237 = vmatpush1.msra.mxu0 0.0
    %238 = vmatprep.subr.mxu0 0.0
    %239 = vmatpush1.msra.mxu0 0.0
    %240 = vmatprep.subr.mxu0 0.0
    %241 = vmatpush1.msra.mxu0 0.0
    %242 = vmatprep.mubr.f32.mxu0 %v106
    %243 = vmatmul.mubr.f32.gmra.mrb[0].mxu0 %v99
    %v244 = vpop.f32.mrb[0].mxu0
    %v245 = vadd.f32 %v175, %v244
    %v246 = vpop.f32.mrb[0].mxu0
    %247 = vdwg.mxu0
    %vm248 = vcmask 1041408
    %v249 = vsel %vm248, %v245, 0.0
    %v250 = vrot.slane %v249, 4
    %v251 = vadd.f32 %v249, %v250
    %v252 = vrot.slane %v251, 2
    %v253 = vadd.f32 %v251, %v252
    %v254 = vrot.slane %v253, 1
    %v255 = vadd.f32 %v253, %v254
    %256 = vrot.lane.b32.xlu0 %v255, 64
    %v257 = vpop.permute.xlu0 %256
    %v258 = vadd.f32 %v255, %v257
    %259 = vrot.lane.b32.xlu0 %v258, 32
    %v260 = vpop.permute.xlu0 %259
    %v261 = vadd.f32 %v258, %v260
    %262 = vrot.lane.b32.xlu0 %v261, 16
    %v263 = vpop.permute.xlu0 %262
    %v264 = vadd.f32 %v261, %v263
    %265 = vrot.lane.b32.xlu0 %v264, 8
    %v266 = vpop.permute.xlu0 %265
    %v267 = vadd.f32 %v264, %v266
    %v268 = vmul.f32 %v267, 0.03125
    %v269 = vlaneseq
    %v270 = vshrl.u32 %v269, 7
    %v271 = vsub.s32 0, %v270
    %v272 = vrot.slane %v268, %v271
    %v273 = vsub.f32 %v245, %v272
    %v274 = vmul.f32 %v273, %v273
    %v275 = vsel %vm248, %v274, 0.0
    %v276 = vrot.slane %v275, 4
    %v277 = vadd.f32 %v275, %v276
    %v278 = vrot.slane %v277, 2
    %v279 = vadd.f32 %v277, %v278
    %v280 = vrot.slane %v279, 1
    %v281 = vadd.f32 %v279, %v280
    %282 = vrot.lane.b32.xlu0 %v281, 64
    %v283 = vpop.permute.xlu0 %282
    %v284 = vadd.f32 %v281, %v283
    %285 = vrot.lane.b32.xlu0 %v284, 32
    %v286 = vpop.permute.xlu0 %285
    %v287 = vadd.f32 %v284, %v286
    %288 = vrot.lane.b32.xlu0 %v287, 16
    %v289 = vpop.permute.xlu0 %288
    %v290 = vadd.f32 %v287, %v289
    %291 = vrot.lane.b32.xlu0 %v290, 8
    %v292 = vpop.permute.xlu0 %291
    %v293 = vadd.f32 %v290, %v292
    %v294 = vmul.f32 %v293, 0.03125
    %v295 = vadd.f32 %v294, 1e-05
    %v296 = vrsqrt.pop %v295
    %v297 = vlaneseq
    %v298 = vshrl.u32 %v297, 7
    %v299 = vsub.s32 0, %v298
    %v300 = vrot.slane %v296, %v299
    %v301 = vmul.f32 %v273, %v300
    %v302 = vld [vmem:[%s2 + $0x1] sm:$0x1]
    %v303 = vlaneseq
    %v304 = vshrl.u32 %v303, 7
    %v305 = vsub.s32 0, %v304
    %v306 = vrot.slane %v302, %v305
    %v307 = vmul.f32 %v301, %v306
    %v308 = vld [vmem:[%s2 + $0x2] sm:$0x1]
    %v309 = vlaneseq
    %v310 = vshrl.u32 %v309, 7
    %v311 = vsub.s32 0, %v310
    %v312 = vrot.slane %v308, %v311
    %v313 = vadd.f32 %v307, %v312
    %v314 = vmax.f32 %v313, 0.0
    %v315 = vld [vmem:[%s3] sm:$0xff]
    %v316 = vld [vmem:[%s3 + $0x8] sm:$0xff]
    %v317 = vld [vmem:[%s3 + $0x10] sm:$0xff]
    %v318 = vld [vmem:[%s3 + $0x18] sm:$0xff]
    %v319 = vld [vmem:[%s3 + $0x20] sm:$0xff]
    %v320 = vld [vmem:[%s3 + $0x28] sm:$0xff]
    %v321 = vld [vmem:[%s3 + $0x30] sm:$0xff]
    %v322 = vld [vmem:[%s3 + $0x38] sm:$0xff]
    %v323 = vld [vmem:[%s3 + $0x40] sm:$0xff]
    %v324 = vld [vmem:[%s3 + $0x48] sm:$0xff]
    %v325 = vld [vmem:[%s3 + $0x50] sm:$0xff]
    %v326 = vld [vmem:[%s3 + $0x58] sm:$0xff]
    %v327 = vld [vmem:[%s3 + $0x60] sm:$0xff]
    %v328 = vld [vmem:[%s3 + $0x68] sm:$0xff]
    %v329 = vld [vmem:[%s3 + $0x70] sm:$0xff]
    %v330 = vld [vmem:[%s3 + $0x78] sm:$0xff]
    %331 = vmatprep.subr.mxu0 0.0
    %332 = vmatpush1.msra.mxu0 %v315
    %333 = vmatprep.subr.mxu0 0.0
    %334 = vmatpush1.msra.mxu0 %v316
    %335 = vmatprep.subr.mxu0 0.0
    %336 = vmatpush1.msra.mxu0 %v317
    %337 = vmatprep.subr.mxu0 0.0
    %338 = vmatpush1.msra.mxu0 %v318
    %339 = vmatprep.subr.mxu0 0.0
    %340 = vmatpush1.msra.mxu0 %v319
    %341 = vmatprep.subr.mxu0 0.0
    %342 = vmatpush1.msra.mxu0 %v320
    %343 = vmatprep.subr.mxu0 0.0
    %344 = vmatpush1.msra.mxu0 %v321
    %345 = vmatprep.subr.mxu0 0.0
    %346 = vmatpush1.msra.mxu0 %v322
    %347 = vmatprep.subr.mxu0 0.0
    %348 = vmatpush1.msra.mxu0 %v323
    %349 = vmatprep.subr.mxu0 0.0
    %350 = vmatpush1.msra.mxu0 %v324
    %351 = vmatprep.subr.mxu0 0.0
    %352 = vmatpush1.msra.mxu0 %v325
    %353 = vmatprep.subr.mxu0 0.0
    %354 = vmatpush1.msra.mxu0 %v326
    %355 = vmatprep.subr.mxu0 0.0
    %356 = vmatpush1.msra.mxu0 %v327
    %357 = vmatprep.subr.mxu0 0.0
    %358 = vmatpush1.msra.mxu0 %v328
    %359 = vmatprep.subr.mxu0 0.0
    %360 = vmatpush1.msra.mxu0 %v329
    %361 = vmatprep.subr.mxu0 0.0
    %362 = vmatpush1.msra.mxu0 %v330
    %363 = vmatprep.subr.mxu0 0.0
    %364 = vmatpush1.msra.mxu0 0.0
    %365 = vmatprep.subr.mxu0 0.0
    %366 = vmatpush1.msra.mxu0 0.0
    %367 = vmatprep.subr.mxu0 0.0
    %368 = vmatpush1.msra.mxu0 0.0
    %369 = vmatprep.subr.mxu0 0.0
    %370 = vmatpush1.msra.mxu0 0.0
    %371 = vmatprep.subr.mxu0 0.0
    %372 = vmatpush1.msra.mxu0 0.0
    %373 = vmatprep.subr.mxu0 0.0
    %374 = vmatpush1.msra.mxu0 0.0
    %375 = vmatprep.subr.mxu0 0.0
    %376 = vmatpush1.msra.mxu0 0.0
    %377 = vmatprep.subr.mxu0 0.0
    %378 = vmatpush1.msra.mxu0 0.0
    %379 = vmatprep.subr.mxu0 0.0
    %380 = vmatpush1.msra.mxu0 0.0
    %381 = vmatprep.subr.mxu0 0.0
    %382 = vmatpush1.msra.mxu0 0.0
    %383 = vmatprep.subr.mxu0 0.0
    %384 = vmatpush1.msra.mxu0 0.0
    %385 = vmatprep.subr.mxu0 0.0
    %386 = vmatpush1.msra.mxu0 0.0
    %387 = vmatprep.subr.mxu0 0.0
    %388 = vmatpush1.msra.mxu0 0.0
    %389 = vmatprep.subr.mxu0 0.0
    %390 = vmatpush1.msra.mxu0 0.0
    %391 = vmatprep.subr.mxu0 0.0
    %392 = vmatpush1.msra.mxu0 0.0
    %393 = vmatprep.subr.mxu0 0.0
    %394 = vmatpush1.msra.mxu0 0.0
    %395 = vmatprep.mubr.f32.mxu0 0.0
    %396 = vmatmul.mubr.f32.gmra.mrb[0].mxu0 %v314
    %v397 = vpop.f32.mrb[0].mxu0
    %v398 = vadd.f32 0.0, %v397
    %v399 = vpop.f32.mrb[0].mxu0
    %400 = vdwg.mxu0
    %v401 = vld [vmem:[%s4] sm:$0xff]
    %v402 = vld [vmem:[%s4 + $0x8] sm:$0xff]
    %v403 = vld [vmem:[%s5] sm:$0x1]
    %v405 = vlaneseq
    %v406 = vshrl.u32 %v405, 7
    %v407 = vsub.s32 0, %v406
    %v408 = vrot.slane %v403, %v407
    %vm410 = vcmask 130048
    %v412 = vsel %vm410, %v398, 0
    %414 = vmatprep.subr.mxu0 0.0
    %415 = vmatpush1.msra.mxu0 %v401
    %416 = vmatprep.subr.mxu0 0.0
    %417 = vmatpush1.msra.mxu0 %v402
    %418 = vmatprep.subr.mxu0 0.0
    %419 = vmatpush1.msra.mxu0 0.0
    %420 = vmatprep.subr.mxu0 0.0
    %421 = vmatpush1.msra.mxu0 0.0
    %422 = vmatprep.subr.mxu0 0.0
    %423 = vmatpush1.msra.mxu0 0.0
    %424 = vmatprep.subr.mxu0 0.0
    %425 = vmatpush1.msra.mxu0 0.0
    %426 = vmatprep.subr.mxu0 0.0
    %427 = vmatpush1.msra.mxu0 0.0
    %428 = vmatprep.subr.mxu0 0.0
    %429 = vmatpush1.msra.mxu0 0.0
    %430 = vmatprep.subr.mxu0 0.0
    %431 = vmatpush1.msra.mxu0 0.0
    %432 = vmatprep.subr.mxu0 0.0
    %433 = vmatpush1.msra.mxu0 0.0
    %434 = vmatprep.subr.mxu0 0.0
    %435 = vmatpush1.msra.mxu0 0.0
    %436 = vmatprep.subr.mxu0 0.0
    %437 = vmatpush1.msra.mxu0 0.0
    %438 = vmatprep.subr.mxu0 0.0
    %439 = vmatpush1.msra.mxu0 0.0
    %440 = vmatprep.subr.mxu0 0.0
    %441 = vmatpush1.msra.mxu0 0.0
    %442 = vmatprep.subr.mxu0 0.0
    %443 = vmatpush1.msra.mxu0 0.0
    %444 = vmatprep.subr.mxu0 0.0
    %445 = vmatpush1.msra.mxu0 0.0
    %446 = vmatprep.subr.mxu0 0.0
    %447 = vmatpush1.msra.mxu0 0.0
    %448 = vmatprep.subr.mxu0 0.0
    %449 = vmatpush1.msra.mxu0 0.0
    %450 = vmatprep.subr.mxu0 0.0
    %451 = vmatpush1.msra.mxu0 0.0
    %452 = vmatprep.subr.mxu0 0.0
    %453 = vmatpush1.msra.mxu0 0.0
    %454 = vmatprep.subr.mxu0 0.0
    %455 = vmatpush1.msra.mxu0 0.0
    %456 = vmatprep.subr.mxu0 0.0
    %457 = vmatpush1.msra.mxu0 0.0
    %458 = vmatprep.subr.mxu0 0.0
    %459 = vmatpush1.msra.mxu0 0.0
    %460 = vmatprep.subr.mxu0 0.0
    %461 = vmatpush1.msra.mxu0 0.0
    %462 = vmatprep.subr.mxu0 0.0
    %463 = vmatpush1.msra.mxu0 0.0
    %464 = vmatprep.subr.mxu0 0.0
    %465 = vmatpush1.msra.mxu0 0.0
    %466 = vmatprep.subr.mxu0 0.0
    %467 = vmatpush1.msra.mxu0 0.0
    %468 = vmatprep.subr.mxu0 0.0
    %469 = vmatpush1.msra.mxu0 0.0
    %470 = vmatprep.subr.mxu0 0.0
    %471 = vmatpush1.msra.mxu0 0.0
    %472 = vmatprep.subr.mxu0 0.0
    %473 = vmatpush1.msra.mxu0 0.0
    %474 = vmatprep.subr.mxu0 0.0
    %475 = vmatpush1.msra.mxu0 0.0
    %476 = vmatprep.subr.mxu0 0.0
    %477 = vmatpush1.msra.mxu0 0.0
    %478 = vmatprep.mubr.f32.mxu0 0.0
    %479 = vmatmul.mubr.f32.gmra.mrb[0].mxu0 %v412
    %v480 = vpop.f32.mrb[0].mxu0
    %v481 = vadd.f32 %v408, %v480
    %v482 = vpop.f32.mrb[0].mxu0
    %483 = vdwg.mxu0
    %vm484 = vcmask 9216
    %485 = vst.msk [vmem:[#allocation2] sm:$0x3] %vm484, %v481
    // Predicated region
    $region26: #{testnet_forward.1} parent=1 // pred_check
      _
    $region27: #{testnet_forward.1} parent=1 // pred_check_branch
      %487 = sbr.rel (0) target = $region29
    $region28: #{testnet_forward.1} parent=1 // pred_region
      %s489 = ssub.s32 32, 32
      %490 = vsyncadd [#allocation3], %s489
      %s492 = sshll.u32 [#allocation2], 4
      %s493 = int_to_ptr.vmem [resolvable:$true] %s492
      %495 = dma.vmem_to_hbm [thread:$0]  %s493, 32, %s6, [#allocation3]
    $region29: #{testnet_forward.1} parent=1 // pred_fallthru
      _
    // Predicated region
    $region30: #{testnet_forward.1} parent=1 // pred_check
      _
    $region31: #{testnet_forward.1} parent=1 // pred_check_branch
      %497 = sbr.rel (0) target = $region33
    $region32: #{testnet_forward.1} parent=1 // pred_region
      %498 = dma.done [#allocation3], 32
    $region33: #{testnet_forward.1} parent=1 // pred_fallthru
      _
    %499 = vsyncpa [#allocation3], 1

</llo_original>
